<compile_context>
chip_gen: v6e
topology: v6e:2x2x1
jax: 0.10.0
libtpu: 0.0.40
codegen_flags: <defaults>
</compile_context>

<pallas_src>
import jax
import jax.numpy as jnp
from jax.experimental import pallas as pl
from jax.experimental.pallas import tpu as pltpu


def _fuse_kernel(xl_ref, xp_ref, wl_ref, wp_ref, b_ref, o_ref):
    # (F, Cl) @ (Cl, T)  +  (F, Cp) @ (Cp, T)  +  (F, 1)  ->  (F, T)
    acc = jnp.dot(wl_ref[...], xl_ref[...], preferred_element_type=jnp.float32)
    acc = acc + jnp.dot(wp_ref[...], xp_ref[...],
                        preferred_element_type=jnp.float32)
    o_ref[...] = (acc + b_ref[...]).astype(o_ref.dtype)


def _pick_tile_hw(hw, batch, max_tile, min_total_steps=4):
    """Choose a lane tile for the flattened H*W axis.

    Tiles are multiples of 128 (unmasked lane-dense stores), as large as
    allowed (amortize the ~0.35us/step overhead, long contiguous DMA rows),
    but shrunk until the grid has >= min_total_steps steps so both v7x
    TensorCores get work and DMA for step i+1 overlaps compute on step i.
    Very small hw uses the full extent (full-dim blocks are always legal).
    """
    if hw < 256:
        return hw
    max_tile = max(128, max_tile - max_tile % 128)
    thw = min(max_tile, (hw // 128) * 128)
    while thw > 128 and batch * pl.cdiv(hw, thw) < min_total_steps:
        thw = max(128, ((thw // 2) // 128) * 128)
    return thw


def fuse_layer(latent_features, pose_features, params, *,
               max_tile_hw=32768, activation_dtype=None,
               small_fallback=True, small_bytes_threshold=512 * 1024):
    """latent_features: (B, Cl, H, W), pose_features: (B, Cp, H, W)  [NCHW]
    params: dict with wl (Cl,F), bl (1,F), wp (Cp,F), bp (1,F),
                      wf (2F,F), bf (1,F)   (stored for the x @ W convention).
    Returns (B, F, H, W) in `activation_dtype` (default: input dtype)."""
    B, Cl, H, W = latent_features.shape
    Bp, Cp, Hp, Wp_ = pose_features.shape
    assert (B, H, W) == (Bp, Hp, Wp_)
    Fc = params["wl"].shape[1]
    HW = H * W
    act_dt = (jnp.dtype(activation_dtype) if activation_dtype is not None
              else latent_features.dtype)

    # ---- Fold the three convs into one affine map (exact: all-linear chain).
    # Done in f32 at highest precision, cast once afterwards.
    f32 = jnp.float32
    hi = jax.lax.Precision.HIGHEST
    wf = params["wf"].astype(f32)
    wf_l, wf_p = wf[:Fc], wf[Fc:]             # torch.cat((latent, pose)) order
    wl_f = jnp.matmul(params["wl"].astype(f32), wf_l,
                      precision=hi).T.astype(act_dt)                 # (F, Cl)
    wp_f = jnp.matmul(params["wp"].astype(f32), wf_p,
                      precision=hi).T.astype(act_dt)                 # (F, Cp)
    b_f = (jnp.matmul(params["bl"].astype(f32), wf_l, precision=hi)
           + jnp.matmul(params["bp"].astype(f32), wf_p, precision=hi)
           + params["bf"].astype(f32)).T                             # (F, 1) f32

    # ---- NCHW consumed directly: (B, C, H, W) -> (B, C, H*W), H*W on lanes.
    xl = latent_features.reshape(B, Cl, HW).astype(act_dt)
    xp = pose_features.reshape(B, Cp, HW).astype(act_dt)

    # ---- Tiny problems: pallas_call launch + per-step overhead dominates,
    # XLA's fused path is already optimal. Same folded weights, same math.
    total_bytes = B * HW * (Cl + Cp + Fc) * jnp.dtype(act_dt).itemsize
    if small_fallback and total_bytes < small_bytes_threshold:
        acc = jnp.einsum("fc,bct->bft", wl_f.astype(f32), xl.astype(f32),
                         precision=hi)
        acc = acc + jnp.einsum("fc,bct->bft", wp_f.astype(f32), xp.astype(f32),
                               precision=hi)
        return (acc + b_f[None]).astype(act_dt).reshape(B, Fc, H, W)

    thw = _pick_tile_hw(HW, B, max_tile_hw)
    n_hw = pl.cdiv(HW, thw)   # ragged tail block is masked by Pallas

    # VMEM budget: activation/output tiles are double-buffered by the
    # pipeline; weights/bias have a constant block index so they are fetched
    # once and stay resident. Cap under v7x's per-core physical VMEM.
    bpe = jnp.dtype(act_dt).itemsize
    pad8 = lambda c: -(-c // 8) * 8
    tile_bytes = (pad8(Cl) + pad8(Cp) + pad8(Fc)) * thw * bpe
    weight_bytes = 2 * pad8(Fc) * 128 * bpe + pad8(Fc) * 128 * 4
    vmem_limit = int(min(max(2 * tile_bytes + weight_bytes + (4 << 20),
                             32 << 20),
                         56 << 20))

    const_spec = lambda shape: pl.BlockSpec(shape, lambda b, i: (0, 0))

    out = pl.pallas_call(
        _fuse_kernel,
        out_shape=jax.ShapeDtypeStruct((B, Fc, HW), act_dt),
        grid_spec=pltpu.PrefetchScalarGridSpec(
            num_scalar_prefetch=0,
            grid=(B, n_hw),
            in_specs=[
                pl.BlockSpec((None, Cl, thw), lambda b, i: (b, 0, i)),  # latent
                pl.BlockSpec((None, Cp, thw), lambda b, i: (b, 0, i)),  # pose
                const_spec((Fc, Cl)),   # folded latent weight (VMEM-resident)
                const_spec((Fc, Cp)),   # folded pose weight
                const_spec((Fc, 1)),    # folded bias (f32)
            ],
            out_specs=pl.BlockSpec((None, Fc, thw), lambda b, i: (b, 0, i)),
        ),
        compiler_params=pltpu.CompilerParams(
            dimension_semantics=("parallel", "parallel"),
            vmem_limit_bytes=vmem_limit),
    )(xl, xp, wl_f, wp_f, b_f)

    # (B, F, H*W) is already NCHW-flat: a pure reshape, no transpose.
    return out.reshape(B, Fc, H, W)


def init_params(key, latent_channels, pose_channels, fusion_channels,
                dtype=jnp.float32):
    """Deterministic synthetic init. PyTorch conv weights are (Cout, Cin, 1, 1);
    we store the equivalent (Cin, Cout) matrices for x @ W."""
    ks = jax.random.split(key, 6)
    F = fusion_channels
    return {
        "wl": (jax.random.normal(ks[0], (latent_channels, F)) * 0.1).astype(dtype),
        "bl": (jax.random.normal(ks[1], (1, F)) * 0.1).astype(dtype),
        "wp": (jax.random.normal(ks[2], (pose_channels, F)) * 0.1).astype(dtype),
        "bp": (jax.random.normal(ks[3], (1, F)) * 0.1).astype(dtype),
        "wf": (jax.random.normal(ks[4], (2 * F, F)) * 0.1).astype(dtype),
        "bf": (jax.random.normal(ks[5], (1, F)) * 0.1).astype(dtype),
    }


def fuse_layer_ref(latent_features, pose_features, params):
    """Plain-JAX reference mirroring the PyTorch module (unfolded math)."""
    B, Cl, H, W = latent_features.shape
    Cp = pose_features.shape[1]
    F = params["wl"].shape[1]
    hi = jax.lax.Precision.HIGHEST
    xl = jnp.transpose(latent_features, (0, 2, 3, 1)).reshape(-1, Cl)
    xp = jnp.transpose(pose_features, (0, 2, 3, 1)).reshape(-1, Cp)
    lat = jnp.matmul(xl, params["wl"], precision=hi) + params["bl"]
    pos = jnp.matmul(xp, params["wp"], precision=hi) + params["bp"]
    fused = jnp.matmul(jnp.concatenate([lat, pos], axis=-1), params["wf"],
                       precision=hi) + params["bf"]
    return jnp.transpose(fused.reshape(B, H, W, F), (0, 3, 1, 2))


if __name__ == "__main__":
    key = jax.random.PRNGKey(0)
    k_lat, k_pose, k_par, k_lat2, k_pose2 = jax.random.split(key, 5)

    latent_channels, pose_channels, fusion_channels = 4, 6, 8
    params = init_params(k_par, latent_channels, pose_channels, fusion_channels)

    # --- Small shape from the module spec; force the Pallas path.
    B, H, W = 2, 16, 16
    latent = jax.random.normal(k_lat, (B, latent_channels, H, W), jnp.float32)
    pose = jax.random.normal(k_pose, (B, pose_channels, H, W), jnp.float32)

    out = fuse_layer(latent, pose, params, small_fallback=False)
    out = jax.block_until_ready(out)
    ref = fuse_layer_ref(latent, pose, params)
    assert out.shape == (B, fusion_channels, H, W)
    assert jnp.allclose(out, ref, atol=2e-3, rtol=2e-3), \
        float(jnp.max(jnp.abs(out - ref)))

    # Same small shape through the small-problem fallback (default behavior).
    out_fb = jax.block_until_ready(fuse_layer(latent, pose, params))
    assert jnp.allclose(out_fb, ref, atol=2e-3, rtol=2e-3)

    # --- Slightly larger, non-128-divisible spatial: exercises the cdiv grid,
    # the ragged (masked) tail block and the >=4-step tiling path.
    B2, H2, W2 = 2, 48, 40   # H*W = 1920
    latent2 = jax.random.normal(k_lat2, (B2, latent_channels, H2, W2), jnp.float32)
    pose2 = jax.random.normal(k_pose2, (B2, pose_channels, H2, W2), jnp.float32)
    out2 = jax.block_until_ready(
        fuse_layer(latent2, pose2, params, small_fallback=False))
    ref2 = fuse_layer_ref(latent2, pose2, params)
    assert out2.shape == (B2, fusion_channels, H2, W2)
    assert jnp.allclose(out2, ref2, atol=2e-3, rtol=2e-3), \
        float(jnp.max(jnp.abs(out2 - ref2)))

    print("KERNEL_OK")
</pallas_src>

<mosaic_0001>
module attributes {stable_mosaic.version = 11 : i64} {
  func.func @_fuse_kernel(%arg0: i32, %arg1: i32, %arg2: memref<1x4x128xf32, #tpu.memory_space<vmem>>, %arg3: memref<1x6x128xf32, #tpu.memory_space<vmem>>, %arg4: memref<8x4xf32, #tpu.memory_space<vmem>>, %arg5: memref<8x6xf32, #tpu.memory_space<vmem>>, %arg6: memref<8x1xf32, #tpu.memory_space<vmem>>, %arg7: memref<1x8x128xf32, #tpu.memory_space<vmem>>) attributes {dimension_semantics = [#tpu.dimension_semantics<parallel>, #tpu.dimension_semantics<parallel>], iteration_bounds = array<i64: 2, 2>, scalar_prefetch = 0 : i64, scratch_operands = 0 : i64, tpu.core_type = #tpu.core_type<tc>, window_params = [{transform_indices = @transform_0, window_bounds = array<i64: 1, 4, 128>}, {transform_indices = @transform_1, window_bounds = array<i64: 1, 6, 128>}, {pipeline_mode = #tpu.pipeline_mode<synchronous>, transform_indices = @transform_2, window_bounds = array<i64: 8, 4>}, {pipeline_mode = #tpu.pipeline_mode<synchronous>, transform_indices = @transform_3, window_bounds = array<i64: 8, 6>}, {pipeline_mode = #tpu.pipeline_mode<synchronous>, transform_indices = @transform_4, window_bounds = array<i64: 8, 1>}, {transform_indices = @transform_5, window_bounds = array<i64: 1, 8, 128>}]} {
    %c0 = arith.constant 0 : index
    %c0_0 = arith.constant 0 : index
    %0 = vector.load %arg4[%c0, %c0_0] : memref<8x4xf32, #tpu.memory_space<vmem>>, vector<8x4xf32>
    %c0_1 = arith.constant 0 : index
    %c0_2 = arith.constant 0 : index
    %c0_3 = arith.constant 0 : index
    %1 = vector.load %arg2[%c0_1, %c0_2, %c0_3] : memref<1x4x128xf32, #tpu.memory_space<vmem>>, vector<1x4x128xf32>
    %2 = vector.shape_cast %1 : vector<1x4x128xf32> to vector<4x128xf32>
    %cst = arith.constant dense<0.000000e+00> : vector<8x128xf32>
    %3 = tpu.matmul %0, %2, %cst {dimension_numbers = #tpu.dot_dimension_numbers<[1], [0], [0], [1], [0, 0, 1, 1], [], []>} : vector<8x4xf32>, vector<4x128xf32>, vector<8x128xf32> -> vector<8x128xf32>
    %c0_4 = arith.constant 0 : index
    %c0_5 = arith.constant 0 : index
    %4 = vector.load %arg5[%c0_4, %c0_5] : memref<8x6xf32, #tpu.memory_space<vmem>>, vector<8x6xf32>
    %c0_6 = arith.constant 0 : index
    %c0_7 = arith.constant 0 : index
    %c0_8 = arith.constant 0 : index
    %5 = vector.load %arg3[%c0_6, %c0_7, %c0_8] : memref<1x6x128xf32, #tpu.memory_space<vmem>>, vector<1x6x128xf32>
    %6 = vector.shape_cast %5 : vector<1x6x128xf32> to vector<6x128xf32>
    %cst_9 = arith.constant dense<0.000000e+00> : vector<8x128xf32>
    %7 = tpu.matmul %4, %6, %cst_9 {dimension_numbers = #tpu.dot_dimension_numbers<[1], [0], [0], [1], [0, 0, 1, 1], [], []>} : vector<8x6xf32>, vector<6x128xf32>, vector<8x128xf32> -> vector<8x128xf32>
    %8 = arith.addf %3, %7 : vector<8x128xf32>
    %c0_10 = arith.constant 0 : index
    %c0_11 = arith.constant 0 : index
    %9 = vector.load %arg6[%c0_10, %c0_11] : memref<8x1xf32, #tpu.memory_space<vmem>>, vector<8x1xf32>
    %10 = vector.broadcast %9 : vector<8x1xf32> to vector<8x128xf32>
    %11 = arith.addf %8, %10 : vector<8x128xf32>
    %c0_12 = arith.constant 0 : index
    %c0_13 = arith.constant 0 : index
    %c0_14 = arith.constant 0 : index
    %12 = vector.load %arg7[%c0_12, %c0_13, %c0_14] : memref<1x8x128xf32, #tpu.memory_space<vmem>>, vector<1x8x128xf32>
    %13 = vector.shape_cast %12 : vector<1x8x128xf32> to vector<8x128xf32>
    %14 = vector.shape_cast %11 : vector<8x128xf32> to vector<1x8x128xf32>
    tpu.vector_store %arg7[%c0_12, %c0_13, %c0_14], %14 {strides = array<i32>} : memref<1x8x128xf32, #tpu.memory_space<vmem>>, vector<1x8x128xf32>,
    return
  }
  func.func @transform_0(%arg0: i32, %arg1: i32) -> (i32, i32, i32) {
    %c0_i32 = arith.constant 0 : i32
    %c0_i32_0 = arith.constant 0 : i32
    return %arg0, %c0_i32, %arg1 : i32, i32, i32
  }
  func.func @transform_1(%arg0: i32, %arg1: i32) -> (i32, i32, i32) {
    %c0_i32 = arith.constant 0 : i32
    %c0_i32_0 = arith.constant 0 : i32
    return %arg0, %c0_i32, %arg1 : i32, i32, i32
  }
  func.func @transform_2(%arg0: i32, %arg1: i32) -> (i32, i32) {
    %c0_i32 = arith.constant 0 : i32
    %c0_i32_0 = arith.constant 0 : i32
    %c0_i32_1 = arith.constant 0 : i32
    return %c0_i32, %c0_i32_0 : i32, i32
  }
  func.func @transform_3(%arg0: i32, %arg1: i32) -> (i32, i32) {
    %c0_i32 = arith.constant 0 : i32
    %c0_i32_0 = arith.constant 0 : i32
    %c0_i32_1 = arith.constant 0 : i32
    return %c0_i32, %c0_i32_0 : i32, i32
  }
  func.func @transform_4(%arg0: i32, %arg1: i32) -> (i32, i32) {
    %c0_i32 = arith.constant 0 : i32
    %c0_i32_0 = arith.constant 0 : i32
    %c0_i32_1 = arith.constant 0 : i32
    return %c0_i32, %c0_i32_0 : i32, i32
  }
  func.func @transform_5(%arg0: i32, %arg1: i32) -> (i32, i32, i32) {
    %c0_i32 = arith.constant 0 : i32
    %c0_i32_0 = arith.constant 0 : i32
    return %arg0, %c0_i32, %arg1 : i32, i32, i32
  }
}

</mosaic_0001>

<llo_original>
// kernel: tpu_custom_call.1
$region0: #{tpu_custom_call.1}
  #allocation0 [shape = 'u32[]', space=smem, size = 0x4, offset = 0x4, fixed_abs, tag = 'smem constant byte address 0x4 - core index']
  #allocation1 [shape = 'u32[144,128]{1,0:T(1,128)}', space=vmem, size = 0x12000, scoped, tag = 'internal scratch']
  %s0 = inlined_call_operand.vmem [shape: f32[2,4,256], index: 0, kind: input, shape index: {}]
  %s1 = inlined_call_operand.vmem [shape: f32[2,6,256], index: 1, kind: input, shape index: {}]
  %s2 = inlined_call_operand.vmem [shape: f32[8,4], index: 2, kind: input, shape index: {}]
  %s3 = inlined_call_operand.vmem [shape: f32[8,6], index: 3, kind: input, shape index: {}]
  %s4 = inlined_call_operand.vmem [shape: f32[8,1], index: 4, kind: input, shape index: {}]
  %s5 = inlined_call_operand.hbm [shape: f32[2,8,256], index: 5, kind: output, shape index: {}]
  %s6 = sld [smem:[#allocation0]]
  $region53: #{tpu_custom_call.1} parent=0
    _
  %s8 = ssub.s32 1, %s6
  %s9 = scalar_select 0, %s8, %s6
  $region1: #{tpu_custom_call.1} parent=0
    #allocation2 [shape = 'u8[8192]{0}', space=vmem, size = 0x2000, scoped, tag = 'output window, operand 0']
    #allocation3 [shape = 's32[2]{0}', space=sflag, size = 0x8, scoped, tag = 'scoped memory for tpu_custom_call.1']
    %10 = vsyncpa [#allocation3], 0
    %s11 = scalar_lea.sflag [#allocation3], 1
    %12 = vsyncpa %s11, 0
    loop: start=0, step=1, limit=6
    $region2: #{tpu_custom_call.1} parent=1 // loop_pre_header
      _
    $region3: #{tpu_custom_call.1} parent=1 // loop_header
      %s14 = sphi 0, %s18
      %p15 = scmp.ge.s32.totalorder %s14, 6
      %s21 = sphi 0, %s33
      %s22 = sphi 0, %s29
      %s23 = sphi 0, %s21
      %s24 = sphi 0, %s22
      %s25 = sphi 0, %s23
      %s26 = sphi 0, %s24
      %s38 = sphi 0, %s40
      %s41 = sphi 0, %s38
      %s42 = sphi 0, %s41
      %s58 = sphi 0, %s42
      %s66 = sphi 0, %s68
      %s69 = sphi 0, %s66
      %s70 = sphi 0, %s69
      %s86 = sphi 0, %s70
      %s90 = sphi 0, %s90
      %s92 = sphi 0, %s90
      %s93 = sphi 0, %s92
      %s107 = sphi 0, %s93
      %s111 = sphi 0, %s111
      %s113 = sphi 0, %s111
      %s114 = sphi 0, %s113
      %s128 = sphi 0, %s114
      %s132 = sphi 0, %s132
      %s134 = sphi 0, %s132
      %s135 = sphi 0, %s134
      %s149 = sphi 0, %s135
      %s157 = sphi 0, %s159
      %s160 = sphi 0, %s157
      %s161 = sphi 0, %s160
      %s177 = sphi 0, %s161
    $region4: #{tpu_custom_call.1} parent=1 // loop_header_branch
      %17 = sbr.rel (%p15) target = $region8
    $region5: #{tpu_custom_call.1} parent=1 // loop_body
      %s19 = ssub.s32 %s14, 1
      %s20 = ssub.s32 %s14, 2
      %s27 = sadd.s32 1, %s22
      %p28 = scmp.ge.s32.totalorder %s27, 2
      %s29 = scalar_select %p28, 0, %s27
      %s30 = sadd.s32 1, %s21
      %s31 = scalar_select %p28, %s30, %s21
      %p32 = scmp.ge.s32.totalorder %s31, 2
      %s33 = scalar_select %p32, 0, %s31
      %s34 = ssub.s32 %s21, %s33
      %s35 = ssub.s32 %s22, %s29
      %s36 = sor.u32 %s34, %s35
      %p37 = scmp.eq.s32.totalorder %s36, 0
      %s39 = sadd.s32 %s38, 1
      %s40 = scalar_select %p37, %s38, %s39
      %p43 = pneg %p37
      %p44 = scmp.eq.s32.totalorder %s14, 3
      %p45 = por %p43, %p44
      %p46 = scmp.ne.s32.totalorder %s38, %s41
      %p47 = scmp.eq.s32.totalorder %s14, 0
      %p48 = por %p46, %p47
      %p49 = scmp.ne.s32.totalorder %s38, %s41
      %p50 = scmp.eq.s32.totalorder %s19, 3
      %p51 = por %p49, %p50
      %p52 = scmp.ne.s32.totalorder %s41, %s42
      %p53 = scmp.eq.s32.totalorder %s19, 0
      %p54 = por %p52, %p53
      %p55 = scmp.ne.s32.totalorder %s41, %s42
      %p56 = scmp.eq.s32.totalorder %s20, 3
      %p57 = por %p55, %p56
      %p59 = scmp.ne.s32.totalorder %s42, %s58
      %p60 = scmp.eq.s32.totalorder %s20, 0
      %p61 = por %p59, %p60
      %s62 = ssub.s32 %s21, %s33
      %s63 = ssub.s32 %s22, %s29
      %s64 = sor.u32 %s62, %s63
      %p65 = scmp.eq.s32.totalorder %s64, 0
      %s67 = sadd.s32 %s66, 1
      %s68 = scalar_select %p65, %s66, %s67
      %p71 = pneg %p65
      %p72 = scmp.eq.s32.totalorder %s14, 3
      %p73 = por %p71, %p72
      %p74 = scmp.ne.s32.totalorder %s66, %s69
      %p75 = scmp.eq.s32.totalorder %s14, 0
      %p76 = por %p74, %p75
      %p77 = scmp.ne.s32.totalorder %s66, %s69
      %p78 = scmp.eq.s32.totalorder %s19, 3
      %p79 = por %p77, %p78
      %p80 = scmp.ne.s32.totalorder %s69, %s70
      %p81 = scmp.eq.s32.totalorder %s19, 0
      %p82 = por %p80, %p81
      %p83 = scmp.ne.s32.totalorder %s69, %s70
      %p84 = scmp.eq.s32.totalorder %s20, 3
      %p85 = por %p83, %p84
      %p87 = scmp.ne.s32.totalorder %s70, %s86
      %p88 = scmp.eq.s32.totalorder %s20, 0
      %p89 = por %p87, %p88
      %s91 = sadd.s32 %s90, 1
      %p94 = scmp.eq.s32.totalorder %s14, 3
      %p95 = scmp.ne.s32.totalorder %s90, %s92
      %p96 = scmp.eq.s32.totalorder %s14, 0
      %p97 = por %p95, %p96
      %p98 = scmp.ne.s32.totalorder %s90, %s92
      %p99 = scmp.eq.s32.totalorder %s19, 3
      %p100 = por %p98, %p99
      %p101 = scmp.ne.s32.totalorder %s92, %s93
      %p102 = scmp.eq.s32.totalorder %s19, 0
      %p103 = por %p101, %p102
      %p104 = scmp.ne.s32.totalorder %s92, %s93
      %p105 = scmp.eq.s32.totalorder %s20, 3
      %p106 = por %p104, %p105
      %p108 = scmp.ne.s32.totalorder %s93, %s107
      %p109 = scmp.eq.s32.totalorder %s20, 0
      %p110 = por %p108, %p109
      %s112 = sadd.s32 %s111, 1
      %p115 = scmp.eq.s32.totalorder %s14, 3
      %p116 = scmp.ne.s32.totalorder %s111, %s113
      %p117 = scmp.eq.s32.totalorder %s14, 0
      %p118 = por %p116, %p117
      %p119 = scmp.ne.s32.totalorder %s111, %s113
      %p120 = scmp.eq.s32.totalorder %s19, 3
      %p121 = por %p119, %p120
      %p122 = scmp.ne.s32.totalorder %s113, %s114
      %p123 = scmp.eq.s32.totalorder %s19, 0
      %p124 = por %p122, %p123
      %p125 = scmp.ne.s32.totalorder %s113, %s114
      %p126 = scmp.eq.s32.totalorder %s20, 3
      %p127 = por %p125, %p126
      %p129 = scmp.ne.s32.totalorder %s114, %s128
      %p130 = scmp.eq.s32.totalorder %s20, 0
      %p131 = por %p129, %p130
      %s133 = sadd.s32 %s132, 1
      %p136 = scmp.eq.s32.totalorder %s14, 3
      %p137 = scmp.ne.s32.totalorder %s132, %s134
      %p138 = scmp.eq.s32.totalorder %s14, 0
      %p139 = por %p137, %p138
      %p140 = scmp.ne.s32.totalorder %s132, %s134
      %p141 = scmp.eq.s32.totalorder %s19, 3
      %p142 = por %p140, %p141
      %p143 = scmp.ne.s32.totalorder %s134, %s135
      %p144 = scmp.eq.s32.totalorder %s19, 0
      %p145 = por %p143, %p144
      %p146 = scmp.ne.s32.totalorder %s134, %s135
      %p147 = scmp.eq.s32.totalorder %s20, 3
      %p148 = por %p146, %p147
      %p150 = scmp.ne.s32.totalorder %s135, %s149
      %p151 = scmp.eq.s32.totalorder %s20, 0
      %p152 = por %p150, %p151
      %s153 = ssub.s32 %s21, %s33
      %s154 = ssub.s32 %s22, %s29
      %s155 = sor.u32 %s153, %s154
      %p156 = scmp.eq.s32.totalorder %s155, 0
      %s158 = sadd.s32 %s157, 1
      %s159 = scalar_select %p156, %s157, %s158
      %p162 = pneg %p156
      %p163 = scmp.eq.s32.totalorder %s14, 3
      %p164 = por %p162, %p163
      %p165 = scmp.ne.s32.totalorder %s157, %s160
      %p166 = scmp.eq.s32.totalorder %s14, 0
      %p167 = por %p165, %p166
      %p168 = scmp.ne.s32.totalorder %s157, %s160
      %p169 = scmp.eq.s32.totalorder %s19, 3
      %p170 = por %p168, %p169
      %p171 = scmp.ne.s32.totalorder %s160, %s161
      %p172 = scmp.eq.s32.totalorder %s19, 0
      %p173 = por %p171, %p172
      %p174 = scmp.ne.s32.totalorder %s160, %s161
      %p175 = scmp.eq.s32.totalorder %s20, 3
      %p176 = por %p174, %p175
      %p178 = scmp.ne.s32.totalorder %s161, %s177
      %p179 = scmp.eq.s32.totalorder %s20, 0
      %p180 = por %p178, %p179
      %p181 = scmp.le.s32.totalorder 1, %s14
      %p182 = scmp.lt.s32.totalorder %s14, 5
      %p183 = pnand %p181, %p182
      %p184 = pneg %p183
      // Predicated region
      $region9: #{tpu_custom_call.1} parent=5 // pred_check
        _
      $region10: #{tpu_custom_call.1} parent=5 // pred_check_branch
        %186 = sbr.rel (%p183) target = $region12
      $region11: #{tpu_custom_call.1} parent=5 // pred_region
        %s187 = ssub.s32 %s14, 1
        // Predicated region
        $region13: #{tpu_custom_call.1} parent=11 // pred_check
          %p188 = pneg %p103
        $region14: #{tpu_custom_call.1} parent=11 // pred_check_branch
          %190 = sbr.rel (%p188) target = $region16
        $region15: #{tpu_custom_call.1} parent=11 // pred_region
          _
        $region16: #{tpu_custom_call.1} parent=11 // pred_fallthru
          _
        // Predicated region
        $region17: #{tpu_custom_call.1} parent=11 // pred_check
          %p191 = pneg %p124
        $region18: #{tpu_custom_call.1} parent=11 // pred_check_branch
          %193 = sbr.rel (%p191) target = $region20
        $region19: #{tpu_custom_call.1} parent=11 // pred_region
          _
        $region20: #{tpu_custom_call.1} parent=11 // pred_fallthru
          _
        // Predicated region
        $region21: #{tpu_custom_call.1} parent=11 // pred_check
          %p194 = pneg %p145
        $region22: #{tpu_custom_call.1} parent=11 // pred_check_branch
          %196 = sbr.rel (%p194) target = $region24
        $region23: #{tpu_custom_call.1} parent=11 // pred_region
          _
        $region24: #{tpu_custom_call.1} parent=11 // pred_fallthru
          _
      $region12: #{tpu_custom_call.1} parent=5 // pred_fallthru
        _
      %p197 = scmp.lt.s32.totalorder %s14, 4
      // Predicated region
      $region25: #{tpu_custom_call.1} parent=5 // pred_check
        %p198 = pneg %p197
      $region26: #{tpu_custom_call.1} parent=5 // pred_check_branch
        %200 = sbr.rel (%p198) target = $region28
      $region27: #{tpu_custom_call.1} parent=5 // pred_region
        // Predicated region
        $region29: #{tpu_custom_call.1} parent=27 // pred_check
          %p201 = pneg %p48
        $region30: #{tpu_custom_call.1} parent=27 // pred_check_branch
          %203 = sbr.rel (%p201) target = $region32
        $region31: #{tpu_custom_call.1} parent=27 // pred_region
          %p204 = scmp.lt.s32.totalorder %s21, 1
          %s205 = scalar_select %p204, %s21, 1
          %p206 = scmp.lt.s32.totalorder %s22, 1
          %s207 = scalar_select %p206, %s22, 1
          %s208 = smul.addr %s205, 2
          %s209 = sadd.s32 %s207, %s208
          %s210 = smul.addr %s209, 4
          %s211 = scalar_lea.vmem %s0, %s210
        $region32: #{tpu_custom_call.1} parent=27 // pred_fallthru
          _
        // Predicated region
        $region33: #{tpu_custom_call.1} parent=27 // pred_check
          %p212 = pneg %p76
        $region34: #{tpu_custom_call.1} parent=27 // pred_check_branch
          %214 = sbr.rel (%p212) target = $region36
        $region35: #{tpu_custom_call.1} parent=27 // pred_region
          %p215 = scmp.lt.s32.totalorder %s21, 1
          %s216 = scalar_select %p215, %s21, 1
          %p217 = scmp.lt.s32.totalorder %s22, 1
          %s218 = scalar_select %p217, %s22, 1
          %s219 = smul.addr %s216, 2
          %s220 = sadd.s32 %s218, %s219
          %s221 = smul.addr %s220, 8
          %s222 = scalar_lea.vmem %s1, %s221
        $region36: #{tpu_custom_call.1} parent=27 // pred_fallthru
          _
      $region28: #{tpu_custom_call.1} parent=5 // pred_fallthru
        _
      %p223 = scmp.le.s32.totalorder 1, %s14
      %p224 = scmp.lt.s32.totalorder %s14, 5
      %p225 = pnand %p223, %p224
      %p226 = pneg %p225
      // Predicated region
      $region37: #{tpu_custom_call.1} parent=5 // pred_check
        _
      $region38: #{tpu_custom_call.1} parent=5 // pred_check_branch
        %228 = sbr.rel (%p225) target = $region40
      $region39: #{tpu_custom_call.1} parent=5 // pred_region
        %s229 = ssub.s32 %s14, 1
        %p230 = scmp.lt.s32.totalorder %s23, 1
        %s231 = scalar_select %p230, %s23, 1
        %p232 = scmp.lt.s32.totalorder %s24, 1
        %s233 = scalar_select %p232, %s24, 1
        %s234 = smul.addr %s231, 2
        %s235 = sadd.s32 %s233, %s234
        %s236 = smul.addr %s235, 4
        %s237 = scalar_lea.vmem %s0, %s236
        %p238 = pneg %p54
        %p239 = pneg %p51
        %p240 = scmp.lt.s32.totalorder %s23, 1
        %s241 = scalar_select %p240, %s23, 1
        %p242 = scmp.lt.s32.totalorder %s24, 1
        %s243 = scalar_select %p242, %s24, 1
        %s244 = smul.addr %s241, 2
        %s245 = sadd.s32 %s243, %s244
        %s246 = smul.addr %s245, 8
        %s247 = scalar_lea.vmem %s1, %s246
        %p248 = pneg %p82
        %p249 = pneg %p79
        %p250 = pneg %p103
        %p251 = pneg %p100
        %p252 = pneg %p124
        %p253 = pneg %p121
        %p254 = pneg %p145
        %p255 = pneg %p142
        %p256 = pneg %p173
        %p257 = pneg %p170
        %s258 = sand.u32 %s160, 1
        %s259 = scalar_lea.sflag [#allocation3], %s258
        %s260 = sand.u32 %s160, 1
        %s261 = smul.addr %s260, 8
        %s262 = scalar_lea.vmem [#allocation2], %s261
        %p263 = scmp.lt.s32.totalorder %s23, 1
        %s264 = scalar_select %p263, %s23, 1
        %p265 = scmp.lt.s32.totalorder %s24, 1
        %s266 = scalar_select %p265, %s24, 1
        %s267 = smul.addr %s264, 2
        %s268 = sadd.s32 %s266, %s267
        %s269 = smul.addr %s268, 4
        %s270 = scalar_lea.vmem %s0, %s269
        %p271 = scmp.lt.s32.totalorder %s23, 1
        %s272 = scalar_select %p271, %s23, 1
        %p273 = scmp.lt.s32.totalorder %s24, 1
        %s274 = scalar_select %p273, %s24, 1
        %s275 = smul.addr %s272, 2
        %s276 = sadd.s32 %s274, %s275
        %s277 = smul.addr %s276, 8
        %s278 = scalar_lea.vmem %s1, %s277
        %v279 = vld [vmem:[%s2] sm:$0xff]
        %v280 = vld [vmem:[%s270] sm:$0xf]
        %v281 = vld [vmem:[%s3] sm:$0xff]
        %v282 = vld [vmem:[%s278] sm:$0x3f]
        %vm283 = vcmask 48128
        %v285 = vsel %vm283, %v281, 0
        %vm287 = vcmask 1045504
        %v289 = vsel %vm287, %v282, 0
        %291 = vmatprep.subr.mxu0 0.0
        %292 = vmatpush1.msra.mxu0 0.0
        %293 = vmatprep.subr.mxu0 0.0
        %294 = vmatpush1.msra.mxu0 0.0
        %295 = vmatprep.subr.mxu0 0.0
        %296 = vmatpush1.msra.mxu0 0.0
        %297 = vmatprep.subr.mxu0 0.0
        %298 = vmatpush1.msra.mxu0 0.0
        %299 = vmatprep.subr.mxu0 0.0
        %300 = vmatpush1.msra.mxu0 0.0
        %301 = vmatprep.subr.mxu0 0.0
        %302 = vmatpush1.msra.mxu0 0.0
        %303 = vmatprep.subr.mxu0 0.0
        %304 = vmatpush1.msra.mxu0 0.0
        %305 = vmatprep.subr.mxu0 0.0
        %306 = vmatpush1.msra.mxu0 0.0
        %307 = vmatprep.subr.mxu0 0.0
        %308 = vmatpush1.msra.mxu0 0.0
        %309 = vmatprep.subr.mxu0 0.0
        %310 = vmatpush1.msra.mxu0 0.0
        %311 = vmatprep.subr.mxu0 0.0
        %312 = vmatpush1.msra.mxu0 0.0
        %313 = vmatprep.subr.mxu0 0.0
        %314 = vmatpush1.msra.mxu0 0.0
        %315 = vmatprep.subr.mxu0 0.0
        %316 = vmatpush1.msra.mxu0 0.0
        %317 = vmatprep.subr.mxu0 0.0
        %318 = vmatpush1.msra.mxu0 0.0
        %319 = vmatprep.subr.mxu0 0.0
        %320 = vmatpush1.msra.mxu0 0.0
        %321 = vmatprep.subr.mxu0 0.0
        %322 = vmatpush1.msra.mxu0 %v289
        %323 = vmatprep.subr.mxu0 0.0
        %324 = vmatpush2.msra.mxu0 0.0
        %325 = vmatprep.subr.mxu0 0.0
        %326 = vmatpush2.msra.mxu0 0.0
        %327 = vmatprep.subr.mxu0 0.0
        %328 = vmatpush2.msra.mxu0 0.0
        %329 = vmatprep.subr.mxu0 0.0
        %330 = vmatpush2.msra.mxu0 0.0
        %331 = vmatprep.subr.mxu0 0.0
        %332 = vmatpush2.msra.mxu0 0.0
        %333 = vmatprep.subr.mxu0 0.0
        %334 = vmatpush2.msra.mxu0 0.0
        %335 = vmatprep.subr.mxu0 0.0
        %336 = vmatpush2.msra.mxu0 0.0
        %337 = vmatprep.subr.mxu0 0.0
        %338 = vmatpush2.msra.mxu0 0.0
        %339 = vmatprep.subr.mxu0 0.0
        %340 = vmatpush2.msra.mxu0 0.0
        %341 = vmatprep.subr.mxu0 0.0
        %342 = vmatpush2.msra.mxu0 0.0
        %343 = vmatprep.subr.mxu0 0.0
        %344 = vmatpush2.msra.mxu0 0.0
        %345 = vmatprep.subr.mxu0 0.0
        %346 = vmatpush2.msra.mxu0 0.0
        %347 = vmatprep.subr.mxu0 0.0
        %348 = vmatpush2.msra.mxu0 0.0
        %349 = vmatprep.subr.mxu0 0.0
        %350 = vmatpush2.msra.mxu0 0.0
        %351 = vmatprep.subr.mxu0 0.0
        %352 = vmatpush2.msra.mxu0 0.0
        %353 = vmatprep.subr.mxu0 0.0
        %354 = vmatpush2.msra.mxu0 0.0
        %355 = vmatprep.mubr.f32.mxu0 0.0
        %356 = vmatmul.mubr.f32.gmra.mxu0 %v285
        %v357 = vpop.f32.mrf.mxu0
        %v358 = vadd.f32 0.0, %v357
        %v359 = vpop.f32.mrf.mxu0
        %360 = vdwg.mxu0
        %vm361 = vcmask 31744
        %v363 = vsel %vm361, %v279, 0
        %vm365 = vcmask 1043456
        %v367 = vsel %vm365, %v280, 0
        %369 = vmatprep.subr.mxu0 0.0
        %370 = vmatpush1.msra.mxu0 0.0
        %371 = vmatprep.subr.mxu0 0.0
        %372 = vmatpush1.msra.mxu0 0.0
        %373 = vmatprep.subr.mxu0 0.0
        %374 = vmatpush1.msra.mxu0 0.0
        %375 = vmatprep.subr.mxu0 0.0
        %376 = vmatpush1.msra.mxu0 0.0
        %377 = vmatprep.subr.mxu0 0.0
        %378 = vmatpush1.msra.mxu0 0.0
        %379 = vmatprep.subr.mxu0 0.0
        %380 = vmatpush1.msra.mxu0 0.0
        %381 = vmatprep.subr.mxu0 0.0
        %382 = vmatpush1.msra.mxu0 0.0
        %383 = vmatprep.subr.mxu0 0.0
        %384 = vmatpush1.msra.mxu0 0.0
        %385 = vmatprep.subr.mxu0 0.0
        %386 = vmatpush1.msra.mxu0 0.0
        %387 = vmatprep.subr.mxu0 0.0
        %388 = vmatpush1.msra.mxu0 0.0
        %389 = vmatprep.subr.mxu0 0.0
        %390 = vmatpush1.msra.mxu0 0.0
        %391 = vmatprep.subr.mxu0 0.0
        %392 = vmatpush1.msra.mxu0 0.0
        %393 = vmatprep.subr.mxu0 0.0
        %394 = vmatpush1.msra.mxu0 0.0
        %395 = vmatprep.subr.mxu0 0.0
        %396 = vmatpush1.msra.mxu0 0.0
        %397 = vmatprep.subr.mxu0 0.0
        %398 = vmatpush1.msra.mxu0 0.0
        %399 = vmatprep.subr.mxu0 0.0
        %400 = vmatpush1.msra.mxu0 %v367
        %401 = vmatprep.subr.mxu0 0.0
        %402 = vmatpush2.msra.mxu0 0.0
        %403 = vmatprep.subr.mxu0 0.0
        %404 = vmatpush2.msra.mxu0 0.0
        %405 = vmatprep.subr.mxu0 0.0
        %406 = vmatpush2.msra.mxu0 0.0
        %407 = vmatprep.subr.mxu0 0.0
        %408 = vmatpush2.msra.mxu0 0.0
        %409 = vmatprep.subr.mxu0 0.0
        %410 = vmatpush2.msra.mxu0 0.0
        %411 = vmatprep.subr.mxu0 0.0
        %412 = vmatpush2.msra.mxu0 0.0
        %413 = vmatprep.subr.mxu0 0.0
        %414 = vmatpush2.msra.mxu0 0.0
        %415 = vmatprep.subr.mxu0 0.0
        %416 = vmatpush2.msra.mxu0 0.0
        %417 = vmatprep.subr.mxu0 0.0
        %418 = vmatpush2.msra.mxu0 0.0
        %419 = vmatprep.subr.mxu0 0.0
        %420 = vmatpush2.msra.mxu0 0.0
        %421 = vmatprep.subr.mxu0 0.0
        %422 = vmatpush2.msra.mxu0 0.0
        %423 = vmatprep.subr.mxu0 0.0
        %424 = vmatpush2.msra.mxu0 0.0
        %425 = vmatprep.subr.mxu0 0.0
        %426 = vmatpush2.msra.mxu0 0.0
        %427 = vmatprep.subr.mxu0 0.0
        %428 = vmatpush2.msra.mxu0 0.0
        %429 = vmatprep.subr.mxu0 0.0
        %430 = vmatpush2.msra.mxu0 0.0
        %431 = vmatprep.subr.mxu0 0.0
        %432 = vmatpush2.msra.mxu0 0.0
        %433 = vmatprep.mubr.f32.mxu0 0.0
        %434 = vmatmul.mubr.f32.gmra.mxu0 %v363
        %v435 = vpop.f32.mrf.mxu0
        %v436 = vadd.f32 %v358, %v435
        %v437 = vpop.f32.mrf.mxu0
        %438 = vdwg.mxu0
        %v439 = vld [vmem:[%s4] sm:$0xff]
        %441 = vset.pattern.permute.xlu0 0
        %442 = vperm.xlu0 %441, %v439
        %v443 = vpop.permute.xlu0 %442
        %v445 = vadd.f32 %v436, %v443
        %446 = vst [vmem:[%s262] sm:$0xff] %v445
        %s447 = sand.u32 %s160, 1
        %s448 = scalar_lea.sflag [#allocation3], %s447
        %s449 = sand.u32 %s160, 1
        %s450 = smul.addr %s449, 8
        %s451 = scalar_lea.vmem [#allocation2], %s450
        // Predicated region
        $region41: #{tpu_custom_call.1} parent=39 // pred_check
          %p452 = pneg %p170
        $region42: #{tpu_custom_call.1} parent=39 // pred_check_branch
          %454 = sbr.rel (%p452) target = $region44
        $region43: #{tpu_custom_call.1} parent=39 // pred_region
          %s456 = ssub.s32 128, 128
          %457 = vsyncadd %s448, %s456
          %s458 = smul.addr %s23, 2
          %s459 = sadd.s32 %s24, %s458
          %s460 = smul.addr %s459, 128
          %s461 = scalar_lea.hbm %s5, %s460
          %s463 = sshll.u32 %s451, 4
          %s464 = int_to_ptr.vmem [resolvable:$true] %s463
          %466 = dma.vmem_to_hbm [thread:$0]  %s464, 128, %s461, %s448
        $region44: #{tpu_custom_call.1} parent=39 // pred_fallthru
          _
      $region40: #{tpu_custom_call.1} parent=5 // pred_fallthru
        _
      %p467 = scmp.le.s32.totalorder 2, %s14
      // Predicated region
      $region45: #{tpu_custom_call.1} parent=5 // pred_check
        %p468 = pneg %p467
      $region46: #{tpu_custom_call.1} parent=5 // pred_check_branch
        %470 = sbr.rel (%p468) target = $region48
      $region47: #{tpu_custom_call.1} parent=5 // pred_region
        %s471 = ssub.s32 %s14, 2
        // Predicated region
        $region49: #{tpu_custom_call.1} parent=47 // pred_check
          %p472 = pneg %p176
        $region50: #{tpu_custom_call.1} parent=47 // pred_check_branch
          %474 = sbr.rel (%p472) target = $region52
        $region51: #{tpu_custom_call.1} parent=47 // pred_region
          %s475 = sand.u32 %s161, 1
          %s476 = scalar_lea.sflag [#allocation3], %s475
          %s477 = sand.u32 %s161, 1
          %s478 = smul.addr %s477, 8
          %s479 = scalar_lea.vmem [#allocation2], %s478
          %480 = dma.done %s476, 128
        $region52: #{tpu_custom_call.1} parent=47 // pred_fallthru
          _
      $region48: #{tpu_custom_call.1} parent=5 // pred_fallthru
        _
    $region6: #{tpu_custom_call.1} parent=1 // loop_footer
      %s18 = sadd.s32 1, %s14
    $region7: #{tpu_custom_call.1} parent=1 // loop_footer_branch
      %13 = sbr.rel target = $region3
    $region8: #{tpu_custom_call.1} parent=1 // loop_exit
      _
    %481 = vsyncpa [#allocation3], 1
    %s482 = scalar_lea.sflag [#allocation3], 1
    %483 = vsyncpa %s482, 1

</llo_original>
